<compile_context>
chip_gen: v7x
topology: tpu7x:2x2x1
jax: 0.10.0
libtpu: 0.0.40
codegen_flags: <defaults>
</compile_context>

<pallas_src>
import functools

import jax
import jax.numpy as jnp
from jax.experimental import pallas as pl
from jax.experimental.pallas import tpu as pltpu

_VMEM_LIMIT = 32 * 1024 * 1024  # conservative: fits v5e/v6e and v7x (64 MiB phys)


# ----------------------------------------------------------------------------
# Pallas kernels
# ----------------------------------------------------------------------------
def _pw_bn_relu_kernel(x_ref, w_ref, s_ref, b_ref, o_ref):
    """1x1 conv (matmul, bf16 operands) + folded BN + ReLU."""
    y = jnp.dot(x_ref[...], w_ref[...], preferred_element_type=jnp.float32)
    y = y * s_ref[...] + b_ref[...]
    o_ref[...] = jnp.maximum(y, 0.0).astype(o_ref.dtype)


def _conv3x3_bn_relu_kernel(x_ref, w_ref, s_ref, b_ref, o_ref, *,
                            HB, Wo, Cin, Cout, stride):
    """3x3 conv (stride fused) + folded BN + ReLU for one block of HB output rows.

    stride == 1: x_ref is (1, H+2, W+2, Cin)          (padded image, resident)
    stride == 2: x_ref is (1, 4, Ho+1, Wo+1, Cin)      (phase-decomposed padded
                 image, resident); phase p = (kh%2)*2 + (kw%2).
    w_ref: (9, Cin, Cout) taps flattened row-major.
    o_ref: (1, HB, Wo, Cout)
    """
    rb = pl.program_id(1)
    r0 = pl.multiple_of(rb * HB, HB)

    acc = jnp.zeros((HB * Wo, Cout), jnp.float32)
    for kh in range(3):
        for kw in range(3):
            if stride == 1:
                patch = x_ref[0, pl.ds(r0 + kh, HB), pl.ds(kw, Wo), :]
            else:
                p = (kh % 2) * 2 + (kw % 2)
                patch = x_ref[0, p, pl.ds(r0 + kh // 2, HB),
                              pl.ds(kw // 2, Wo), :]
            acc = acc + jnp.dot(patch.reshape(HB * Wo, Cin),
                                w_ref[kh * 3 + kw],
                                preferred_element_type=jnp.float32)
    y = acc * s_ref[...] + b_ref[...]
    o_ref[0] = jnp.maximum(y, 0.0).reshape(HB, Wo, Cout).astype(o_ref.dtype)


def _conv3_shortcut_kernel(y_ref, x_ref, w3_ref, ws_ref, s3_ref, b3_ref,
                           ss_ref, bs_ref, o_ref, *, HB, Wo, planes, Cin, Cout):
    """conv3(1x1)+BN3  +  shortcut conv(1x1)+BNs  + add + ReLU, fully fused."""
    m = y_ref[0].reshape(HB * Wo, planes)
    y = jnp.dot(m, w3_ref[...], preferred_element_type=jnp.float32)
    y = y * s3_ref[...] + b3_ref[...]

    xs = x_ref[0].reshape(HB * Wo, Cin)
    sc = jnp.dot(xs, ws_ref[...], preferred_element_type=jnp.float32)
    sc = sc * ss_ref[...] + bs_ref[...]

    o_ref[0] = jnp.maximum(y + sc, 0.0).reshape(HB, Wo, Cout).astype(o_ref.dtype)


# ----------------------------------------------------------------------------
# pallas_call wrappers
# ----------------------------------------------------------------------------
def _pointwise_bn_relu(x2d, w, scale, bias):
    M, Cin = x2d.shape
    Cout = w.shape[1]
    tm = min(512, M)                 # fixed row tile; never a whole-M slab
    grid = (pl.cdiv(M, tm),)
    return pl.pallas_call(
        _pw_bn_relu_kernel,
        out_shape=jax.ShapeDtypeStruct((M, Cout), jnp.bfloat16),
        grid=grid,
        in_specs=[
            pl.BlockSpec((tm, Cin), lambda i: (i, 0)),
            pl.BlockSpec((Cin, Cout), lambda i: (0, 0)),
            pl.BlockSpec((1, Cout), lambda i: (0, 0)),
            pl.BlockSpec((1, Cout), lambda i: (0, 0)),
        ],
        out_specs=pl.BlockSpec((tm, Cout), lambda i: (i, 0)),
        compiler_params=pltpu.CompilerParams(
            dimension_semantics=("parallel",),
            vmem_limit_bytes=_VMEM_LIMIT),
    )(x2d, w, scale, bias)


def _conv3x3_bn_relu(x_in, w9, scale, bias, *, stride, N, Ho, Wo, HB):
    Cin, Cout = w9.shape[1], w9.shape[2]
    kernel = functools.partial(_conv3x3_bn_relu_kernel, HB=HB, Wo=Wo,
                               Cin=Cin, Cout=Cout, stride=stride)
    if stride == 1:
        x_spec = pl.BlockSpec((1,) + x_in.shape[1:], lambda n, r: (n, 0, 0, 0))
    else:
        x_spec = pl.BlockSpec((1,) + x_in.shape[1:], lambda n, r: (n, 0, 0, 0, 0))
    return pl.pallas_call(
        kernel,
        out_shape=jax.ShapeDtypeStruct((N, Ho, Wo, Cout), jnp.bfloat16),
        grid=(N, Ho // HB),
        in_specs=[
            x_spec,                                              # image stays resident across row blocks
            pl.BlockSpec((9, Cin, Cout), lambda n, r: (0, 0, 0)),
            pl.BlockSpec((1, Cout), lambda n, r: (0, 0)),
            pl.BlockSpec((1, Cout), lambda n, r: (0, 0)),
        ],
        out_specs=pl.BlockSpec((1, HB, Wo, Cout), lambda n, r: (n, r, 0, 0)),
        compiler_params=pltpu.CompilerParams(
            dimension_semantics=("parallel", "arbitrary"),
            vmem_limit_bytes=_VMEM_LIMIT),
    )(x_in, w9, scale, bias)


def _conv3_shortcut_fused(out2, xs, w3, ws, s3, b3, ss, bs, *, HB):
    N, Ho, Wo, planes = out2.shape
    Cin = xs.shape[-1]
    Cout = w3.shape[1]
    kernel = functools.partial(_conv3_shortcut_kernel, HB=HB, Wo=Wo,
                               planes=planes, Cin=Cin, Cout=Cout)
    return pl.pallas_call(
        kernel,
        out_shape=jax.ShapeDtypeStruct((N, Ho, Wo, Cout), jnp.float32),
        grid=(N, Ho // HB),
        in_specs=[
            pl.BlockSpec((1, HB, Wo, planes), lambda n, r: (n, r, 0, 0)),
            pl.BlockSpec((1, HB, Wo, Cin), lambda n, r: (n, r, 0, 0)),
            pl.BlockSpec((planes, Cout), lambda n, r: (0, 0)),
            pl.BlockSpec((Cin, Cout), lambda n, r: (0, 0)),
            pl.BlockSpec((1, Cout), lambda n, r: (0, 0)),
            pl.BlockSpec((1, Cout), lambda n, r: (0, 0)),
            pl.BlockSpec((1, Cout), lambda n, r: (0, 0)),
            pl.BlockSpec((1, Cout), lambda n, r: (0, 0)),
        ],
        out_specs=pl.BlockSpec((1, HB, Wo, Cout), lambda n, r: (n, r, 0, 0)),
        compiler_params=pltpu.CompilerParams(
            dimension_semantics=("parallel", "parallel"),
            vmem_limit_bytes=_VMEM_LIMIT),
    )(out2, xs, w3, ws, s3, b3, ss, bs)


# ----------------------------------------------------------------------------
# Bottleneck forward
# ----------------------------------------------------------------------------
def _fold_bn(gamma, beta, mean, var, eps=1e-5):
    scale = gamma / jnp.sqrt(var + eps)
    bias = beta - mean * scale
    return scale.reshape(1, -1), bias.reshape(1, -1)


def _pick_row_block(Ho, Wo, target_rows=512):
    """Largest power-of-two divisor of Ho keeping HB*Wo matmul rows <= target."""
    hb = 1
    for d in (2, 4, 8, 16, 32):
        if Ho % d == 0 and d * Wo <= max(Wo, target_rows):
            hb = d
    return hb


def bottleneck_forward(x_nchw, params, stride):
    assert stride in (1, 2)
    # TODO(synk): fold the NCHW<->NHWC transposes into the edge kernels' specs.
    x = jnp.transpose(x_nchw, (0, 2, 3, 1)).astype(jnp.bfloat16)  # NCHW -> NHWC
    N, H, W, Cin = x.shape
    assert H % stride == 0 and W % stride == 0
    planes = params["w1"].shape[1]
    Ho, Wo = H // stride, W // stride

    s1, b1 = _fold_bn(*params["bn1"])
    s2, b2 = _fold_bn(*params["bn2"])
    s3, b3 = _fold_bn(*params["bn3"])
    ssc, bsc = _fold_bn(*params["bns"])

    w1 = params["w1"].astype(jnp.bfloat16)
    w2 = params["w2"].astype(jnp.bfloat16)
    w3 = params["w3"].astype(jnp.bfloat16)
    ws = params["ws"].astype(jnp.bfloat16)

    # conv1 (1x1) + bn1 + relu
    out1 = _pointwise_bn_relu(x.reshape(N * H * W, Cin), w1, s1, b1)
    out1 = out1.reshape(N, H, W, planes)

    # conv2 (3x3, stride fused) + bn2 + relu
    # TODO(synk): fold the halo pad / phase split into the conv2 BlockSpecs.
    x_pad = jnp.pad(out1, ((0, 0), (1, 1), (1, 1), (0, 0)))
    if stride == 1:
        x_in = x_pad                                         # (N, H+2, W+2, planes)
    else:  # space-to-batch: 4 phases of the padded image, all (Ho+1, Wo+1)
        x_in = jnp.stack([x_pad[:, ph::2, pw::2, :]
                          for ph in (0, 1) for pw in (0, 1)], axis=1)
    hb = _pick_row_block(Ho, Wo)
    out2 = _conv3x3_bn_relu(x_in, w2, s2, b2, stride=stride,
                            N=N, Ho=Ho, Wo=Wo, HB=hb)

    # conv3 (1x1) + bn3 + shortcut (1x1, stride) + bns + add + relu, fused
    # TODO(synk): fold the shortcut stride subsample into the BlockSpec
    # index_map instead of materializing xs here.
    xs = x if stride == 1 else x[:, ::stride, ::stride, :]
    out = _conv3_shortcut_fused(out2, xs, w3, ws, s3, b3, ssc, bsc, HB=hb)
    return jnp.transpose(out, (0, 3, 1, 2))  # NHWC -> NCHW


# ----------------------------------------------------------------------------
# Pure-JAX reference (eval-mode BN) for a correctness check
# ----------------------------------------------------------------------------
def _ref_forward(x_nchw, params, stride):
    def bn(y, p):
        g, b, m, v = p
        g = g.reshape(1, -1, 1, 1); b = b.reshape(1, -1, 1, 1)
        m = m.reshape(1, -1, 1, 1); v = v.reshape(1, -1, 1, 1)
        return (y - m) / jnp.sqrt(v + 1e-5) * g + b

    def conv(y, w_oihw, s):
        return jax.lax.conv_general_dilated(
            y, w_oihw, window_strides=(s, s),
            padding=[(0, 0), (0, 0)] if w_oihw.shape[-1] == 1 else [(1, 1), (1, 1)],
            dimension_numbers=("NCHW", "OIHW", "NCHW"))

    w1 = params["w1"].T[:, :, None, None]
    w2 = jnp.transpose(params["w2"].reshape(3, 3, params["w2"].shape[1],
                                            params["w2"].shape[2]), (3, 2, 0, 1))
    w3 = params["w3"].T[:, :, None, None]
    ws = params["ws"].T[:, :, None, None]

    out = jax.nn.relu(bn(conv(x_nchw, w1, 1), params["bn1"]))
    out = jax.nn.relu(bn(conv(out, w2, stride), params["bn2"]))
    out = bn(conv(out, w3, 1), params["bn3"])
    short = bn(conv(x_nchw, ws, stride), params["bns"])
    return jax.nn.relu(out + short)


# ----------------------------------------------------------------------------
# main
# ----------------------------------------------------------------------------
def _make_params(key, in_planes, planes):
    expansion = 4
    cexp = expansion * planes
    ks = jax.random.split(key, 8)

    def bn_params(k, c):
        k1, k2, k3, k4 = jax.random.split(k, 4)
        gamma = 1.0 + 0.1 * jax.random.normal(k1, (c,), jnp.float32)
        beta = 0.1 * jax.random.normal(k2, (c,), jnp.float32)
        mean = 0.1 * jax.random.normal(k3, (c,), jnp.float32)
        var = jnp.abs(jax.random.normal(k4, (c,), jnp.float32)) + 0.5
        return (gamma, beta, mean, var)

    return {
        # 1x1 weights stored as (Cin, Cout) matmul layout
        "w1": 0.2 * jax.random.normal(ks[0], (in_planes, planes), jnp.float32),
        "w2": 0.2 * jax.random.normal(ks[1], (9, planes, planes), jnp.float32),
        "w3": 0.2 * jax.random.normal(ks[2], (planes, cexp), jnp.float32),
        "ws": 0.2 * jax.random.normal(ks[3], (in_planes, cexp), jnp.float32),
        "bn1": bn_params(ks[4], planes),
        "bn2": bn_params(ks[5], planes),
        "bn3": bn_params(ks[6], cexp),
        "bns": bn_params(ks[7], cexp),
    }


if __name__ == "__main__":
    key = jax.random.PRNGKey(0)
    k_x, k_p = jax.random.split(key)

    N, in_planes, H, W = 2, 4, 16, 16
    planes, stride = 4, 2

    x = jax.random.normal(k_x, (N, in_planes, H, W), jnp.float32)
    params = _make_params(k_p, in_planes, planes)

    out = jax.block_until_ready(bottleneck_forward(x, params, stride))
    ref = jax.block_until_ready(_ref_forward(x, params, stride))

    assert out.shape == (N, 4 * planes, H // stride, W // stride), out.shape
    max_err = float(jnp.max(jnp.abs(out - ref)))
    assert jnp.allclose(out, ref, rtol=5e-2, atol=5e-2), max_err

    print("KERNEL_OK")
</pallas_src>

<mosaic_0001>
module attributes {stable_mosaic.version = 11 : i64} {
  func.func @_pw_bn_relu_kernel(%arg0: i32, %arg1: memref<512x4xbf16, #tpu.memory_space<vmem>>, %arg2: memref<4x4xbf16, #tpu.memory_space<vmem>>, %arg3: memref<1x4xf32, #tpu.memory_space<vmem>>, %arg4: memref<1x4xf32, #tpu.memory_space<vmem>>, %arg5: memref<512x4xbf16, #tpu.memory_space<vmem>>) attributes {dimension_semantics = [#tpu.dimension_semantics<parallel>], iteration_bounds = array<i64: 1>, scalar_prefetch = 0 : i64, scratch_operands = 0 : i64, tpu.core_type = #tpu.core_type<tc>, window_params = [{transform_indices = @transform_0, window_bounds = array<i64: 512, 4>}, {pipeline_mode = #tpu.pipeline_mode<synchronous>, transform_indices = @transform_1, window_bounds = array<i64: 4, 4>}, {pipeline_mode = #tpu.pipeline_mode<synchronous>, transform_indices = @transform_2, window_bounds = array<i64: 1, 4>}, {pipeline_mode = #tpu.pipeline_mode<synchronous>, transform_indices = @transform_3, window_bounds = array<i64: 1, 4>}, {transform_indices = @transform_4, window_bounds = array<i64: 512, 4>}]} {
    %c0 = arith.constant 0 : index
    %c0_0 = arith.constant 0 : index
    %0 = vector.load %arg1[%c0, %c0_0] : memref<512x4xbf16, #tpu.memory_space<vmem>>, vector<512x4xbf16>
    %c0_1 = arith.constant 0 : index
    %c0_2 = arith.constant 0 : index
    %1 = vector.load %arg2[%c0_1, %c0_2] : memref<4x4xbf16, #tpu.memory_space<vmem>>, vector<4x4xbf16>
    %cst = arith.constant dense<0.000000e+00> : vector<512x4xf32>
    %2 = tpu.matmul %0, %1, %cst {dimension_numbers = #tpu.dot_dimension_numbers<[1], [0], [0], [1], [0, 0, 1, 1], [], []>} : vector<512x4xbf16>, vector<4x4xbf16>, vector<512x4xf32> -> vector<512x4xf32>
    %c0_3 = arith.constant 0 : index
    %c0_4 = arith.constant 0 : index
    %3 = vector.load %arg3[%c0_3, %c0_4] : memref<1x4xf32, #tpu.memory_space<vmem>>, vector<1x4xf32>
    %4 = vector.broadcast %3 : vector<1x4xf32> to vector<512x4xf32>
    %5 = arith.mulf %2, %4 : vector<512x4xf32>
    %c0_5 = arith.constant 0 : index
    %c0_6 = arith.constant 0 : index
    %6 = vector.load %arg4[%c0_5, %c0_6] : memref<1x4xf32, #tpu.memory_space<vmem>>, vector<1x4xf32>
    %7 = vector.broadcast %6 : vector<1x4xf32> to vector<512x4xf32>
    %8 = arith.addf %5, %7 : vector<512x4xf32>
    %cst_7 = arith.constant 0.000000e+00 : f32
    %9 = vector.broadcast %cst_7 : f32 to vector<512x4xf32>
    %10 = arith.maximumf %8, %9 : vector<512x4xf32>
    %11 = arith.truncf %10 : vector<512x4xf32> to vector<512x4xbf16>
    %c0_8 = arith.constant 0 : index
    %c0_9 = arith.constant 0 : index
    %12 = vector.load %arg5[%c0_8, %c0_9] : memref<512x4xbf16, #tpu.memory_space<vmem>>, vector<512x4xbf16>
    tpu.vector_store %arg5[%c0_8, %c0_9], %11 {strides = array<i32>} : memref<512x4xbf16, #tpu.memory_space<vmem>>, vector<512x4xbf16>,
    return
  }
  func.func @transform_0(%arg0: i32) -> (i32, i32) {
    %c0_i32 = arith.constant 0 : i32
    %c0_i32_0 = arith.constant 0 : i32
    return %arg0, %c0_i32 : i32, i32
  }
  func.func @transform_1(%arg0: i32) -> (i32, i32) {
    %c0_i32 = arith.constant 0 : i32
    %c0_i32_0 = arith.constant 0 : i32
    %c0_i32_1 = arith.constant 0 : i32
    return %c0_i32, %c0_i32_0 : i32, i32
  }
  func.func @transform_2(%arg0: i32) -> (i32, i32) {
    %c0_i32 = arith.constant 0 : i32
    %c0_i32_0 = arith.constant 0 : i32
    %c0_i32_1 = arith.constant 0 : i32
    return %c0_i32, %c0_i32_0 : i32, i32
  }
  func.func @transform_3(%arg0: i32) -> (i32, i32) {
    %c0_i32 = arith.constant 0 : i32
    %c0_i32_0 = arith.constant 0 : i32
    %c0_i32_1 = arith.constant 0 : i32
    return %c0_i32, %c0_i32_0 : i32, i32
  }
  func.func @transform_4(%arg0: i32) -> (i32, i32) {
    %c0_i32 = arith.constant 0 : i32
    %c0_i32_0 = arith.constant 0 : i32
    return %arg0, %c0_i32 : i32, i32
  }
}

</mosaic_0001>

<llo_original>
// kernel: tpu_custom_call.1
$region0: #{tpu_custom_call.1}
  #allocation0 [shape = 'u32[]', space=smem, size = 0x4, offset = 0x4, fixed_abs, tag = 'smem constant byte address 0x4 - core index']
  #allocation1 [shape = 'u32[144,128]{1,0:T(1,128)}', space=vmem, size = 0x12000, scoped, tag = 'internal scratch']
  %s0 = inlined_call_operand.vmem [shape: bf16[512,4], index: 0, kind: input, shape index: {}]
  %s1 = inlined_call_operand.vmem [shape: bf16[4,4], index: 1, kind: input, shape index: {}]
  %s2 = inlined_call_operand.vmem [shape: f32[1,4], index: 2, kind: input, shape index: {}]
  %s3 = inlined_call_operand.vmem [shape: f32[1,4], index: 3, kind: input, shape index: {}]
  %s4 = inlined_call_operand.vmem [shape: bf16[512,4], index: 4, kind: output, shape index: {}]
  %s5 = sld [smem:[#allocation0]]
  $region26: #{tpu_custom_call.1} parent=0
    _
  %s7 = ssub.s32 1, %s5
  %s8 = scalar_select 0, %s7, %s5
  // Predicated region
  $region2: #{tpu_custom_call.1} parent=0 // pred_check
    _
  $region3: #{tpu_custom_call.1} parent=0 // pred_check_branch
    %10 = sbr.rel (0) target = $region5
  $region4: #{tpu_custom_call.1} parent=0 // pred_region
    _
  $region5: #{tpu_custom_call.1} parent=0 // pred_fallthru
    _
  // Predicated region
  $region6: #{tpu_custom_call.1} parent=0 // pred_check
    _
  $region7: #{tpu_custom_call.1} parent=0 // pred_check_branch
    %12 = sbr.rel (0) target = $region9
  $region8: #{tpu_custom_call.1} parent=0 // pred_region
    _
  $region9: #{tpu_custom_call.1} parent=0 // pred_fallthru
    _
  // Predicated region
  $region10: #{tpu_custom_call.1} parent=0 // pred_check
    _
  $region11: #{tpu_custom_call.1} parent=0 // pred_check_branch
    %14 = sbr.rel (0) target = $region13
  $region12: #{tpu_custom_call.1} parent=0 // pred_region
    _
  $region13: #{tpu_custom_call.1} parent=0 // pred_fallthru
    _
  // Predicated region
  $region14: #{tpu_custom_call.1} parent=0 // pred_check
    _
  $region15: #{tpu_custom_call.1} parent=0 // pred_check_branch
    %16 = sbr.rel (0) target = $region17
  $region16: #{tpu_custom_call.1} parent=0 // pred_region
    _
  $region17: #{tpu_custom_call.1} parent=0 // pred_fallthru
    _
  %v18 = vld [vmem:[%s0] sm:$0xf]
  %v19 = vld [vmem:[%s0 + $0x4] sm:$0xf]
  %v20 = vld [vmem:[%s0 + $0x8] sm:$0xf]
  %v21 = vld [vmem:[%s0 + $0xc] sm:$0xf]
  %v22 = vld [vmem:[%s0 + $0x10] sm:$0xf]
  %v23 = vld [vmem:[%s0 + $0x14] sm:$0xf]
  %v24 = vld [vmem:[%s0 + $0x18] sm:$0xf]
  %v25 = vld [vmem:[%s0 + $0x1c] sm:$0xf]
  %v26 = vld [vmem:[%s0 + $0x20] sm:$0xf]
  %v27 = vld [vmem:[%s0 + $0x24] sm:$0xf]
  %v28 = vld [vmem:[%s0 + $0x28] sm:$0xf]
  %v29 = vld [vmem:[%s0 + $0x2c] sm:$0xf]
  %v30 = vld [vmem:[%s0 + $0x30] sm:$0xf]
  %v31 = vld [vmem:[%s0 + $0x34] sm:$0xf]
  %v32 = vld [vmem:[%s0 + $0x38] sm:$0xf]
  %v33 = vld [vmem:[%s0 + $0x3c] sm:$0xf]
  %v34 = vld [vmem:[%s0 + $0x40] sm:$0xf]
  %v35 = vld [vmem:[%s0 + $0x44] sm:$0xf]
  %v36 = vld [vmem:[%s0 + $0x48] sm:$0xf]
  %v37 = vld [vmem:[%s0 + $0x4c] sm:$0xf]
  %v38 = vld [vmem:[%s0 + $0x50] sm:$0xf]
  %v39 = vld [vmem:[%s0 + $0x54] sm:$0xf]
  %v40 = vld [vmem:[%s0 + $0x58] sm:$0xf]
  %v41 = vld [vmem:[%s0 + $0x5c] sm:$0xf]
  %v42 = vld [vmem:[%s0 + $0x60] sm:$0xf]
  %v43 = vld [vmem:[%s0 + $0x64] sm:$0xf]
  %v44 = vld [vmem:[%s0 + $0x68] sm:$0xf]
  %v45 = vld [vmem:[%s0 + $0x6c] sm:$0xf]
  %v46 = vld [vmem:[%s0 + $0x70] sm:$0xf]
  %v47 = vld [vmem:[%s0 + $0x74] sm:$0xf]
  %v48 = vld [vmem:[%s0 + $0x78] sm:$0xf]
  %v49 = vld [vmem:[%s0 + $0x7c] sm:$0xf]
  %v50 = vld [vmem:[%s0 + $0x80] sm:$0xf]
  %v51 = vld [vmem:[%s0 + $0x84] sm:$0xf]
  %v52 = vld [vmem:[%s0 + $0x88] sm:$0xf]
  %v53 = vld [vmem:[%s0 + $0x8c] sm:$0xf]
  %v54 = vld [vmem:[%s0 + $0x90] sm:$0xf]
  %v55 = vld [vmem:[%s0 + $0x94] sm:$0xf]
  %v56 = vld [vmem:[%s0 + $0x98] sm:$0xf]
  %v57 = vld [vmem:[%s0 + $0x9c] sm:$0xf]
  %v58 = vld [vmem:[%s0 + $0xa0] sm:$0xf]
  %v59 = vld [vmem:[%s0 + $0xa4] sm:$0xf]
  %v60 = vld [vmem:[%s0 + $0xa8] sm:$0xf]
  %v61 = vld [vmem:[%s0 + $0xac] sm:$0xf]
  %v62 = vld [vmem:[%s0 + $0xb0] sm:$0xf]
  %v63 = vld [vmem:[%s0 + $0xb4] sm:$0xf]
  %v64 = vld [vmem:[%s0 + $0xb8] sm:$0xf]
  %v65 = vld [vmem:[%s0 + $0xbc] sm:$0xf]
  %v66 = vld [vmem:[%s0 + $0xc0] sm:$0xf]
  %v67 = vld [vmem:[%s0 + $0xc4] sm:$0xf]
  %v68 = vld [vmem:[%s0 + $0xc8] sm:$0xf]
  %v69 = vld [vmem:[%s0 + $0xcc] sm:$0xf]
  %v70 = vld [vmem:[%s0 + $0xd0] sm:$0xf]
  %v71 = vld [vmem:[%s0 + $0xd4] sm:$0xf]
  %v72 = vld [vmem:[%s0 + $0xd8] sm:$0xf]
  %v73 = vld [vmem:[%s0 + $0xdc] sm:$0xf]
  %v74 = vld [vmem:[%s0 + $0xe0] sm:$0xf]
  %v75 = vld [vmem:[%s0 + $0xe4] sm:$0xf]
  %v76 = vld [vmem:[%s0 + $0xe8] sm:$0xf]
  %v77 = vld [vmem:[%s0 + $0xec] sm:$0xf]
  %v78 = vld [vmem:[%s0 + $0xf0] sm:$0xf]
  %v79 = vld [vmem:[%s0 + $0xf4] sm:$0xf]
  %v80 = vld [vmem:[%s0 + $0xf8] sm:$0xf]
  %v81 = vld [vmem:[%s0 + $0xfc] sm:$0xf]
  %v82 = vld [vmem:[%s1] sm:$0x3]
  %v147 = vunpack.c.l.b16 %v18
  %v148 = vunpack.c.l.b16 %v19
  %v149 = vunpack.c.l.b16 %v20
  %v150 = vunpack.c.l.b16 %v21
  %v151 = vunpack.c.l.b16 %v22
  %v152 = vunpack.c.l.b16 %v23
  %v153 = vunpack.c.l.b16 %v24
  %v154 = vunpack.c.l.b16 %v25
  %v155 = vunpack.c.l.b16 %v26
  %v156 = vunpack.c.l.b16 %v27
  %v157 = vunpack.c.l.b16 %v28
  %v158 = vunpack.c.l.b16 %v29
  %v159 = vunpack.c.l.b16 %v30
  %v160 = vunpack.c.l.b16 %v31
  %v161 = vunpack.c.l.b16 %v32
  %v162 = vunpack.c.l.b16 %v33
  %v163 = vunpack.c.l.b16 %v34
  %v164 = vunpack.c.l.b16 %v35
  %v165 = vunpack.c.l.b16 %v36
  %v166 = vunpack.c.l.b16 %v37
  %v167 = vunpack.c.l.b16 %v38
  %v168 = vunpack.c.l.b16 %v39
  %v169 = vunpack.c.l.b16 %v40
  %v170 = vunpack.c.l.b16 %v41
  %v171 = vunpack.c.l.b16 %v42
  %v172 = vunpack.c.l.b16 %v43
  %v173 = vunpack.c.l.b16 %v44
  %v174 = vunpack.c.l.b16 %v45
  %v175 = vunpack.c.l.b16 %v46
  %v176 = vunpack.c.l.b16 %v47
  %v177 = vunpack.c.l.b16 %v48
  %v178 = vunpack.c.l.b16 %v49
  %v179 = vunpack.c.l.b16 %v50
  %v180 = vunpack.c.l.b16 %v51
  %v181 = vunpack.c.l.b16 %v52
  %v182 = vunpack.c.l.b16 %v53
  %v183 = vunpack.c.l.b16 %v54
  %v184 = vunpack.c.l.b16 %v55
  %v185 = vunpack.c.l.b16 %v56
  %v186 = vunpack.c.l.b16 %v57
  %v187 = vunpack.c.l.b16 %v58
  %v188 = vunpack.c.l.b16 %v59
  %v189 = vunpack.c.l.b16 %v60
  %v190 = vunpack.c.l.b16 %v61
  %v191 = vunpack.c.l.b16 %v62
  %v192 = vunpack.c.l.b16 %v63
  %v193 = vunpack.c.l.b16 %v64
  %v194 = vunpack.c.l.b16 %v65
  %v195 = vunpack.c.l.b16 %v66
  %v196 = vunpack.c.l.b16 %v67
  %v197 = vunpack.c.l.b16 %v68
  %v198 = vunpack.c.l.b16 %v69
  %v199 = vunpack.c.l.b16 %v70
  %v200 = vunpack.c.l.b16 %v71
  %v201 = vunpack.c.l.b16 %v72
  %v202 = vunpack.c.l.b16 %v73
  %v203 = vunpack.c.l.b16 %v74
  %v204 = vunpack.c.l.b16 %v75
  %v205 = vunpack.c.l.b16 %v76
  %v206 = vunpack.c.l.b16 %v77
  %v207 = vunpack.c.l.b16 %v78
  %v208 = vunpack.c.l.b16 %v79
  %v209 = vunpack.c.l.b16 %v80
  %v210 = vunpack.c.l.b16 %v81
  %v211 = vpack.c.b16 %v148, %v147
  %v212 = vpack.c.b16 %v150, %v149
  %v213 = vpack.c.b16 %v152, %v151
  %v214 = vpack.c.b16 %v154, %v153
  %v215 = vpack.c.b16 %v156, %v155
  %v216 = vpack.c.b16 %v158, %v157
  %v217 = vpack.c.b16 %v160, %v159
  %v218 = vpack.c.b16 %v162, %v161
  %v219 = vpack.c.b16 %v164, %v163
  %v220 = vpack.c.b16 %v166, %v165
  %v221 = vpack.c.b16 %v168, %v167
  %v222 = vpack.c.b16 %v170, %v169
  %v223 = vpack.c.b16 %v172, %v171
  %v224 = vpack.c.b16 %v174, %v173
  %v225 = vpack.c.b16 %v176, %v175
  %v226 = vpack.c.b16 %v178, %v177
  %v227 = vpack.c.b16 %v180, %v179
  %v228 = vpack.c.b16 %v182, %v181
  %v229 = vpack.c.b16 %v184, %v183
  %v230 = vpack.c.b16 %v186, %v185
  %v231 = vpack.c.b16 %v188, %v187
  %v232 = vpack.c.b16 %v190, %v189
  %v233 = vpack.c.b16 %v192, %v191
  %v234 = vpack.c.b16 %v194, %v193
  %v235 = vpack.c.b16 %v196, %v195
  %v236 = vpack.c.b16 %v198, %v197
  %v237 = vpack.c.b16 %v200, %v199
  %v238 = vpack.c.b16 %v202, %v201
  %v239 = vpack.c.b16 %v204, %v203
  %v240 = vpack.c.b16 %v206, %v205
  %v241 = vpack.c.b16 %v208, %v207
  %v242 = vpack.c.b16 %v210, %v209
  %vm243 = vcmask 31744
  %v245 = vsel %vm243, %v211, 0
  %v248 = vsel %vm243, %v212, 0
  %v251 = vsel %vm243, %v213, 0
  %v254 = vsel %vm243, %v214, 0
  %v257 = vsel %vm243, %v215, 0
  %v260 = vsel %vm243, %v216, 0
  %v263 = vsel %vm243, %v217, 0
  %v266 = vsel %vm243, %v218, 0
  %v269 = vsel %vm243, %v219, 0
  %v272 = vsel %vm243, %v220, 0
  %v275 = vsel %vm243, %v221, 0
  %v278 = vsel %vm243, %v222, 0
  %v281 = vsel %vm243, %v223, 0
  %v284 = vsel %vm243, %v224, 0
  %v287 = vsel %vm243, %v225, 0
  %v290 = vsel %vm243, %v226, 0
  %v293 = vsel %vm243, %v227, 0
  %v296 = vsel %vm243, %v228, 0
  %v299 = vsel %vm243, %v229, 0
  %v302 = vsel %vm243, %v230, 0
  %v305 = vsel %vm243, %v231, 0
  %v308 = vsel %vm243, %v232, 0
  %v311 = vsel %vm243, %v233, 0
  %v314 = vsel %vm243, %v234, 0
  %v317 = vsel %vm243, %v235, 0
  %v320 = vsel %vm243, %v236, 0
  %v323 = vsel %vm243, %v237, 0
  %v326 = vsel %vm243, %v238, 0
  %v329 = vsel %vm243, %v239, 0
  %v332 = vsel %vm243, %v240, 0
  %v335 = vsel %vm243, %v241, 0
  %v338 = vsel %vm243, %v242, 0
  %vm340 = vcmask 1041408
  %v342 = vsel %vm340, %v82, 0
  %344 = vmatprep.subr.bf16.mxu0 0
  %345 = vmatpush1.bf16.msra.mxu0 %v342
  %346 = vmatprep.subr.bf16.mxu0 0
  %347 = vmatpush1.bf16.msra.mxu0 0
  %348 = vmatprep.subr.bf16.mxu0 0
  %349 = vmatpush1.bf16.msra.mxu0 0
  %350 = vmatprep.subr.bf16.mxu0 0
  %351 = vmatpush1.bf16.msra.mxu0 0
  %352 = vmatprep.subr.bf16.mxu0 0
  %353 = vmatpush1.bf16.msra.mxu0 0
  %354 = vmatprep.subr.bf16.mxu0 0
  %355 = vmatpush1.bf16.msra.mxu0 0
  %356 = vmatprep.subr.bf16.mxu0 0
  %357 = vmatpush1.bf16.msra.mxu0 0
  %358 = vmatprep.subr.bf16.mxu0 0
  %359 = vmatpush1.bf16.msra.mxu0 0
  %360 = vmatprep.subr.bf16.mxu0 0
  %361 = vmatpush1.bf16.msra.mxu0 0
  %362 = vmatprep.subr.bf16.mxu0 0
  %363 = vmatpush1.bf16.msra.mxu0 0
  %364 = vmatprep.subr.bf16.mxu0 0
  %365 = vmatpush1.bf16.msra.mxu0 0
  %366 = vmatprep.subr.bf16.mxu0 0
  %367 = vmatpush1.bf16.msra.mxu0 0
  %368 = vmatprep.subr.bf16.mxu0 0
  %369 = vmatpush1.bf16.msra.mxu0 0
  %370 = vmatprep.subr.bf16.mxu0 0
  %371 = vmatpush1.bf16.msra.mxu0 0
  %372 = vmatprep.subr.bf16.mxu0 0
  %373 = vmatpush1.bf16.msra.mxu0 0
  %374 = vmatprep.subr.bf16.mxu0 0
  %375 = vmatpush1.bf16.msra.mxu0 0
  %376 = vmatprep.mubr.bf16.mxu0 0
  %377 = vmatmul.mubr.bf16.gmra.mrb[0].mxu0 %v245
  %v378 = vpop.f32.mrb[0].mxu0
  %v379 = vadd.f32 0.0, %v378
  %v380 = vpop.f32.mrb[0].mxu0
  %v381 = vpop.f32.mrb[0].mxu0
  %v382 = vadd.f32 0.0, %v381
  %v383 = vpop.f32.mrb[0].mxu0
  %384 = vmatprep.mubr.bf16.mxu0 0
  %385 = vmatmul.mubr.bf16.gmra.mrb[0].mxu0 %v248
  %v386 = vpop.f32.mrb[0].mxu0
  %v387 = vadd.f32 0.0, %v386
  %v388 = vpop.f32.mrb[0].mxu0
  %v389 = vpop.f32.mrb[0].mxu0
  %v390 = vadd.f32 0.0, %v389
  %v391 = vpop.f32.mrb[0].mxu0
  %392 = vmatprep.mubr.bf16.mxu0 0
  %393 = vmatmul.mubr.bf16.gmra.mrb[0].mxu0 %v251
  %v394 = vpop.f32.mrb[0].mxu0
  %v395 = vadd.f32 0.0, %v394
  %v396 = vpop.f32.mrb[0].mxu0
  %v397 = vpop.f32.mrb[0].mxu0
  %v398 = vadd.f32 0.0, %v397
  %v399 = vpop.f32.mrb[0].mxu0
  %400 = vmatprep.mubr.bf16.mxu0 0
  %401 = vmatmul.mubr.bf16.gmra.mrb[0].mxu0 %v254
  %v402 = vpop.f32.mrb[0].mxu0
  %v403 = vadd.f32 0.0, %v402
  %v404 = vpop.f32.mrb[0].mxu0
  %v405 = vpop.f32.mrb[0].mxu0
  %v406 = vadd.f32 0.0, %v405
  %v407 = vpop.f32.mrb[0].mxu0
  %408 = vmatprep.mubr.bf16.mxu0 0
  %409 = vmatmul.mubr.bf16.gmra.mrb[0].mxu0 %v257
  %v410 = vpop.f32.mrb[0].mxu0
  %v411 = vadd.f32 0.0, %v410
  %v412 = vpop.f32.mrb[0].mxu0
  %v413 = vpop.f32.mrb[0].mxu0
  %v414 = vadd.f32 0.0, %v413
  %v415 = vpop.f32.mrb[0].mxu0
  %416 = vmatprep.mubr.bf16.mxu0 0
  %417 = vmatmul.mubr.bf16.gmra.mrb[0].mxu0 %v260
  %v418 = vpop.f32.mrb[0].mxu0
  %v419 = vadd.f32 0.0, %v418
  %v420 = vpop.f32.mrb[0].mxu0
  %v421 = vpop.f32.mrb[0].mxu0
  %v422 = vadd.f32 0.0, %v421
  %v423 = vpop.f32.mrb[0].mxu0
  %424 = vmatprep.mubr.bf16.mxu0 0
  %425 = vmatmul.mubr.bf16.gmra.mrb[0].mxu0 %v263
  %v426 = vpop.f32.mrb[0].mxu0
  %v427 = vadd.f32 0.0, %v426
  %v428 = vpop.f32.mrb[0].mxu0
  %v429 = vpop.f32.mrb[0].mxu0
  %v430 = vadd.f32 0.0, %v429
  %v431 = vpop.f32.mrb[0].mxu0
  %432 = vmatprep.mubr.bf16.mxu0 0
  %433 = vmatmul.mubr.bf16.gmra.mrb[0].mxu0 %v266
  %v434 = vpop.f32.mrb[0].mxu0
  %v435 = vadd.f32 0.0, %v434
  %v436 = vpop.f32.mrb[0].mxu0
  %v437 = vpop.f32.mrb[0].mxu0
  %v438 = vadd.f32 0.0, %v437
  %v439 = vpop.f32.mrb[0].mxu0
  %440 = vmatprep.mubr.bf16.mxu0 0
  %441 = vmatmul.mubr.bf16.gmra.mrb[0].mxu0 %v269
  %v442 = vpop.f32.mrb[0].mxu0
  %v443 = vadd.f32 0.0, %v442
  %v444 = vpop.f32.mrb[0].mxu0
  %v445 = vpop.f32.mrb[0].mxu0
  %v446 = vadd.f32 0.0, %v445
  %v447 = vpop.f32.mrb[0].mxu0
  %448 = vmatprep.mubr.bf16.mxu0 0
  %449 = vmatmul.mubr.bf16.gmra.mrb[0].mxu0 %v272
  %v450 = vpop.f32.mrb[0].mxu0
  %v451 = vadd.f32 0.0, %v450
  %v452 = vpop.f32.mrb[0].mxu0
  %v453 = vpop.f32.mrb[0].mxu0
  %v454 = vadd.f32 0.0, %v453
  %v455 = vpop.f32.mrb[0].mxu0
  %456 = vmatprep.mubr.bf16.mxu0 0
  %457 = vmatmul.mubr.bf16.gmra.mrb[0].mxu0 %v275
  %v458 = vpop.f32.mrb[0].mxu0
  %v459 = vadd.f32 0.0, %v458
  %v460 = vpop.f32.mrb[0].mxu0
  %v461 = vpop.f32.mrb[0].mxu0
  %v462 = vadd.f32 0.0, %v461
  %v463 = vpop.f32.mrb[0].mxu0
  %464 = vmatprep.mubr.bf16.mxu0 0
  %465 = vmatmul.mubr.bf16.gmra.mrb[0].mxu0 %v278
  %v466 = vpop.f32.mrb[0].mxu0
  %v467 = vadd.f32 0.0, %v466
  %v468 = vpop.f32.mrb[0].mxu0
  %v469 = vpop.f32.mrb[0].mxu0
  %v470 = vadd.f32 0.0, %v469
  %v471 = vpop.f32.mrb[0].mxu0
  %472 = vmatprep.mubr.bf16.mxu0 0
  %473 = vmatmul.mubr.bf16.gmra.mrb[0].mxu0 %v281
  %v474 = vpop.f32.mrb[0].mxu0
  %v475 = vadd.f32 0.0, %v474
  %v476 = vpop.f32.mrb[0].mxu0
  %v477 = vpop.f32.mrb[0].mxu0
  %v478 = vadd.f32 0.0, %v477
  %v479 = vpop.f32.mrb[0].mxu0
  %480 = vmatprep.mubr.bf16.mxu0 0
  %481 = vmatmul.mubr.bf16.gmra.mrb[0].mxu0 %v284
  %v482 = vpop.f32.mrb[0].mxu0
  %v483 = vadd.f32 0.0, %v482
  %v484 = vpop.f32.mrb[0].mxu0
  %v485 = vpop.f32.mrb[0].mxu0
  %v486 = vadd.f32 0.0, %v485
  %v487 = vpop.f32.mrb[0].mxu0
  %488 = vmatprep.mubr.bf16.mxu0 0
  %489 = vmatmul.mubr.bf16.gmra.mrb[0].mxu0 %v287
  %v490 = vpop.f32.mrb[0].mxu0
  %v491 = vadd.f32 0.0, %v490
  %v492 = vpop.f32.mrb[0].mxu0
  %v493 = vpop.f32.mrb[0].mxu0
  %v494 = vadd.f32 0.0, %v493
  %v495 = vpop.f32.mrb[0].mxu0
  %496 = vmatprep.mubr.bf16.mxu0 0
  %497 = vmatmul.mubr.bf16.gmra.mrb[0].mxu0 %v290
  %v498 = vpop.f32.mrb[0].mxu0
  %v499 = vadd.f32 0.0, %v498
  %v500 = vpop.f32.mrb[0].mxu0
  %v501 = vpop.f32.mrb[0].mxu0
  %v502 = vadd.f32 0.0, %v501
  %v503 = vpop.f32.mrb[0].mxu0
  %504 = vmatprep.mubr.bf16.mxu0 0
  %505 = vmatmul.mubr.bf16.gmra.mrb[0].mxu0 %v293
  %v506 = vpop.f32.mrb[0].mxu0
  %v507 = vadd.f32 0.0, %v506
  %v508 = vpop.f32.mrb[0].mxu0
  %v509 = vpop.f32.mrb[0].mxu0
  %v510 = vadd.f32 0.0, %v509
  %v511 = vpop.f32.mrb[0].mxu0
  %512 = vmatprep.mubr.bf16.mxu0 0
  %513 = vmatmul.mubr.bf16.gmra.mrb[0].mxu0 %v296
  %v514 = vpop.f32.mrb[0].mxu0
  %v515 = vadd.f32 0.0, %v514
  %v516 = vpop.f32.mrb[0].mxu0
  %v517 = vpop.f32.mrb[0].mxu0
  %v518 = vadd.f32 0.0, %v517
  %v519 = vpop.f32.mrb[0].mxu0
  %520 = vmatprep.mubr.bf16.mxu0 0
  %521 = vmatmul.mubr.bf16.gmra.mrb[0].mxu0 %v299
  %v522 = vpop.f32.mrb[0].mxu0
  %v523 = vadd.f32 0.0, %v522
  %v524 = vpop.f32.mrb[0].mxu0
  %v525 = vpop.f32.mrb[0].mxu0
  %v526 = vadd.f32 0.0, %v525
  %v527 = vpop.f32.mrb[0].mxu0
  %528 = vmatprep.mubr.bf16.mxu0 0
  %529 = vmatmul.mubr.bf16.gmra.mrb[0].mxu0 %v302
  %v530 = vpop.f32.mrb[0].mxu0
  %v531 = vadd.f32 0.0, %v530
  %v532 = vpop.f32.mrb[0].mxu0
  %v533 = vpop.f32.mrb[0].mxu0
  %v534 = vadd.f32 0.0, %v533
  %v535 = vpop.f32.mrb[0].mxu0
  %536 = vmatprep.mubr.bf16.mxu0 0
  %537 = vmatmul.mubr.bf16.gmra.mrb[0].mxu0 %v305
  %v538 = vpop.f32.mrb[0].mxu0
  %v539 = vadd.f32 0.0, %v538
  %v540 = vpop.f32.mrb[0].mxu0
  %v541 = vpop.f32.mrb[0].mxu0
  %v542 = vadd.f32 0.0, %v541
  %v543 = vpop.f32.mrb[0].mxu0
  %544 = vmatprep.mubr.bf16.mxu0 0
  %545 = vmatmul.mubr.bf16.gmra.mrb[0].mxu0 %v308
  %v546 = vpop.f32.mrb[0].mxu0
  %v547 = vadd.f32 0.0, %v546
  %v548 = vpop.f32.mrb[0].mxu0
  %v549 = vpop.f32.mrb[0].mxu0
  %v550 = vadd.f32 0.0, %v549
  %v551 = vpop.f32.mrb[0].mxu0
  %552 = vmatprep.mubr.bf16.mxu0 0
  %553 = vmatmul.mubr.bf16.gmra.mrb[0].mxu0 %v311
  %v554 = vpop.f32.mrb[0].mxu0
  %v555 = vadd.f32 0.0, %v554
  %v556 = vpop.f32.mrb[0].mxu0
  %v557 = vpop.f32.mrb[0].mxu0
  %v558 = vadd.f32 0.0, %v557
  %v559 = vpop.f32.mrb[0].mxu0
  %560 = vmatprep.mubr.bf16.mxu0 0
  %561 = vmatmul.mubr.bf16.gmra.mrb[0].mxu0 %v314
  %v562 = vpop.f32.mrb[0].mxu0
  %v563 = vadd.f32 0.0, %v562
  %v564 = vpop.f32.mrb[0].mxu0
  %v565 = vpop.f32.mrb[0].mxu0
  %v566 = vadd.f32 0.0, %v565
  %v567 = vpop.f32.mrb[0].mxu0
  %568 = vmatprep.mubr.bf16.mxu0 0
  %569 = vmatmul.mubr.bf16.gmra.mrb[0].mxu0 %v317
  %v570 = vpop.f32.mrb[0].mxu0
  %v571 = vadd.f32 0.0, %v570
  %v572 = vpop.f32.mrb[0].mxu0
  %v573 = vpop.f32.mrb[0].mxu0
  %v574 = vadd.f32 0.0, %v573
  %v575 = vpop.f32.mrb[0].mxu0
  %576 = vmatprep.mubr.bf16.mxu0 0
  %577 = vmatmul.mubr.bf16.gmra.mrb[0].mxu0 %v320
  %v578 = vpop.f32.mrb[0].mxu0
  %v579 = vadd.f32 0.0, %v578
  %v580 = vpop.f32.mrb[0].mxu0
  %v581 = vpop.f32.mrb[0].mxu0
  %v582 = vadd.f32 0.0, %v581
  %v583 = vpop.f32.mrb[0].mxu0
  %584 = vmatprep.mubr.bf16.mxu0 0
  %585 = vmatmul.mubr.bf16.gmra.mrb[0].mxu0 %v323
  %v586 = vpop.f32.mrb[0].mxu0
  %v587 = vadd.f32 0.0, %v586
  %v588 = vpop.f32.mrb[0].mxu0
  %v589 = vpop.f32.mrb[0].mxu0
  %v590 = vadd.f32 0.0, %v589
  %v591 = vpop.f32.mrb[0].mxu0
  %592 = vmatprep.mubr.bf16.mxu0 0
  %593 = vmatmul.mubr.bf16.gmra.mrb[0].mxu0 %v326
  %v594 = vpop.f32.mrb[0].mxu0
  %v595 = vadd.f32 0.0, %v594
  %v596 = vpop.f32.mrb[0].mxu0
  %v597 = vpop.f32.mrb[0].mxu0
  %v598 = vadd.f32 0.0, %v597
  %v599 = vpop.f32.mrb[0].mxu0
  %600 = vmatprep.mubr.bf16.mxu0 0
  %601 = vmatmul.mubr.bf16.gmra.mrb[0].mxu0 %v329
  %v602 = vpop.f32.mrb[0].mxu0
  %v603 = vadd.f32 0.0, %v602
  %v604 = vpop.f32.mrb[0].mxu0
  %v605 = vpop.f32.mrb[0].mxu0
  %v606 = vadd.f32 0.0, %v605
  %v607 = vpop.f32.mrb[0].mxu0
  %608 = vmatprep.mubr.bf16.mxu0 0
  %609 = vmatmul.mubr.bf16.gmra.mrb[0].mxu0 %v332
  %v610 = vpop.f32.mrb[0].mxu0
  %v611 = vadd.f32 0.0, %v610
  %v612 = vpop.f32.mrb[0].mxu0
  %v613 = vpop.f32.mrb[0].mxu0
  %v614 = vadd.f32 0.0, %v613
  %v615 = vpop.f32.mrb[0].mxu0
  %616 = vmatprep.mubr.bf16.mxu0 0
  %617 = vmatmul.mubr.bf16.gmra.mrb[0].mxu0 %v335
  %v618 = vpop.f32.mrb[0].mxu0
  %v619 = vadd.f32 0.0, %v618
  %v620 = vpop.f32.mrb[0].mxu0
  %v621 = vpop.f32.mrb[0].mxu0
  %v622 = vadd.f32 0.0, %v621
  %v623 = vpop.f32.mrb[0].mxu0
  %624 = vmatprep.mubr.bf16.mxu0 0
  %625 = vmatmul.mubr.bf16.gmra.mrb[0].mxu0 %v338
  %v626 = vpop.f32.mrb[0].mxu0
  %v627 = vadd.f32 0.0, %v626
  %v628 = vpop.f32.mrb[0].mxu0
  %v629 = vpop.f32.mrb[0].mxu0
  %v630 = vadd.f32 0.0, %v629
  %v631 = vpop.f32.mrb[0].mxu0
  %632 = vdwg.mxu0
  %v633 = vld [vmem:[%s2] sm:$0x1]
  %v635 = vlaneseq
  %v636 = vshrl.u32 %v635, 7
  %v637 = vsub.s32 0, %v636
  %v638 = vrot.slane %v633, %v637
  %v640 = vmul.f32 %v379, %v638
  %v641 = vmul.f32 %v382, %v638
  %v642 = vmul.f32 %v387, %v638
  %v643 = vmul.f32 %v390, %v638
  %v644 = vmul.f32 %v395, %v638
  %v645 = vmul.f32 %v398, %v638
  %v646 = vmul.f32 %v403, %v638
  %v647 = vmul.f32 %v406, %v638
  %v648 = vmul.f32 %v411, %v638
  %v649 = vmul.f32 %v414, %v638
  %v650 = vmul.f32 %v419, %v638
  %v651 = vmul.f32 %v422, %v638
  %v652 = vmul.f32 %v427, %v638
  %v653 = vmul.f32 %v430, %v638
  %v654 = vmul.f32 %v435, %v638
  %v655 = vmul.f32 %v438, %v638
  %v656 = vmul.f32 %v443, %v638
  %v657 = vmul.f32 %v446, %v638
  %v658 = vmul.f32 %v451, %v638
  %v659 = vmul.f32 %v454, %v638
  %v660 = vmul.f32 %v459, %v638
  %v661 = vmul.f32 %v462, %v638
  %v662 = vmul.f32 %v467, %v638
  %v663 = vmul.f32 %v470, %v638
  %v664 = vmul.f32 %v475, %v638
  %v665 = vmul.f32 %v478, %v638
  %v666 = vmul.f32 %v483, %v638
  %v667 = vmul.f32 %v486, %v638
  %v668 = vmul.f32 %v491, %v638
  %v669 = vmul.f32 %v494, %v638
  %v670 = vmul.f32 %v499, %v638
  %v671 = vmul.f32 %v502, %v638
  %v672 = vmul.f32 %v507, %v638
  %v673 = vmul.f32 %v510, %v638
  %v674 = vmul.f32 %v515, %v638
  %v675 = vmul.f32 %v518, %v638
  %v676 = vmul.f32 %v523, %v638
  %v677 = vmul.f32 %v526, %v638
  %v678 = vmul.f32 %v531, %v638
  %v679 = vmul.f32 %v534, %v638
  %v680 = vmul.f32 %v539, %v638
  %v681 = vmul.f32 %v542, %v638
  %v682 = vmul.f32 %v547, %v638
  %v683 = vmul.f32 %v550, %v638
  %v684 = vmul.f32 %v555, %v638
  %v685 = vmul.f32 %v558, %v638
  %v686 = vmul.f32 %v563, %v638
  %v687 = vmul.f32 %v566, %v638
  %v688 = vmul.f32 %v571, %v638
  %v689 = vmul.f32 %v574, %v638
  %v690 = vmul.f32 %v579, %v638
  %v691 = vmul.f32 %v582, %v638
  %v692 = vmul.f32 %v587, %v638
  %v693 = vmul.f32 %v590, %v638
  %v694 = vmul.f32 %v595, %v638
  %v695 = vmul.f32 %v598, %v638
  %v696 = vmul.f32 %v603, %v638
  %v697 = vmul.f32 %v606, %v638
  %v698 = vmul.f32 %v611, %v638
  %v699 = vmul.f32 %v614, %v638
  %v700 = vmul.f32 %v619, %v638
  %v701 = vmul.f32 %v622, %v638
  %v702 = vmul.f32 %v627, %v638
  %v703 = vmul.f32 %v630, %v638
  %v704 = vld [vmem:[%s3] sm:$0x1]
  %v706 = vlaneseq
  %v707 = vshrl.u32 %v706, 7
  %v708 = vsub.s32 0, %v707
  %v709 = vrot.slane %v704, %v708
  %v711 = vadd.f32 %v640, %v709
  %v712 = vadd.f32 %v641, %v709
  %v713 = vadd.f32 %v642, %v709
  %v714 = vadd.f32 %v643, %v709
  %v715 = vadd.f32 %v644, %v709
  %v716 = vadd.f32 %v645, %v709
  %v717 = vadd.f32 %v646, %v709
  %v718 = vadd.f32 %v647, %v709
  %v719 = vadd.f32 %v648, %v709
  %v720 = vadd.f32 %v649, %v709
  %v721 = vadd.f32 %v650, %v709
  %v722 = vadd.f32 %v651, %v709
  %v723 = vadd.f32 %v652, %v709
  %v724 = vadd.f32 %v653, %v709
  %v725 = vadd.f32 %v654, %v709
  %v726 = vadd.f32 %v655, %v709
  %v727 = vadd.f32 %v656, %v709
  %v728 = vadd.f32 %v657, %v709
  %v729 = vadd.f32 %v658, %v709
  %v730 = vadd.f32 %v659, %v709
  %v731 = vadd.f32 %v660, %v709
  %v732 = vadd.f32 %v661, %v709
  %v733 = vadd.f32 %v662, %v709
  %v734 = vadd.f32 %v663, %v709
  %v735 = vadd.f32 %v664, %v709
  %v736 = vadd.f32 %v665, %v709
  %v737 = vadd.f32 %v666, %v709
  %v738 = vadd.f32 %v667, %v709
  %v739 = vadd.f32 %v668, %v709
  %v740 = vadd.f32 %v669, %v709
  %v741 = vadd.f32 %v670, %v709
  %v742 = vadd.f32 %v671, %v709
  %v743 = vadd.f32 %v672, %v709
  %v744 = vadd.f32 %v673, %v709
  %v745 = vadd.f32 %v674, %v709
  %v746 = vadd.f32 %v675, %v709
  %v747 = vadd.f32 %v676, %v709
  %v748 = vadd.f32 %v677, %v709
  %v749 = vadd.f32 %v678, %v709
  %v750 = vadd.f32 %v679, %v709
  %v751 = vadd.f32 %v680, %v709
  %v752 = vadd.f32 %v681, %v709
  %v753 = vadd.f32 %v682, %v709
  %v754 = vadd.f32 %v683, %v709
  %v755 = vadd.f32 %v684, %v709
  %v756 = vadd.f32 %v685, %v709
  %v757 = vadd.f32 %v686, %v709
  %v758 = vadd.f32 %v687, %v709
  %v759 = vadd.f32 %v688, %v709
  %v760 = vadd.f32 %v689, %v709
  %v761 = vadd.f32 %v690, %v709
  %v762 = vadd.f32 %v691, %v709
  %v763 = vadd.f32 %v692, %v709
  %v764 = vadd.f32 %v693, %v709
  %v765 = vadd.f32 %v694, %v709
  %v766 = vadd.f32 %v695, %v709
  %v767 = vadd.f32 %v696, %v709
  %v768 = vadd.f32 %v697, %v709
  %v769 = vadd.f32 %v698, %v709
  %v770 = vadd.f32 %v699, %v709
  %v771 = vadd.f32 %v700, %v709
  %v772 = vadd.f32 %v701, %v709
  %v773 = vadd.f32 %v702, %v709
  %v774 = vadd.f32 %v703, %v709
  %v775 = vmax.f32 %v711, 0.0
  %v776 = vmax.f32 %v712, 0.0
  %v777 = vmax.f32 %v713, 0.0
  %v778 = vmax.f32 %v714, 0.0
  %v779 = vmax.f32 %v715, 0.0
  %v780 = vmax.f32 %v716, 0.0
  %v781 = vmax.f32 %v717, 0.0
  %v782 = vmax.f32 %v718, 0.0
  %v783 = vmax.f32 %v719, 0.0
  %v784 = vmax.f32 %v720, 0.0
  %v785 = vmax.f32 %v721, 0.0
  %v786 = vmax.f32 %v722, 0.0
  %v787 = vmax.f32 %v723, 0.0
  %v788 = vmax.f32 %v724, 0.0
  %v789 = vmax.f32 %v725, 0.0
  %v790 = vmax.f32 %v726, 0.0
  %v791 = vmax.f32 %v727, 0.0
  %v792 = vmax.f32 %v728, 0.0
  %v793 = vmax.f32 %v729, 0.0
  %v794 = vmax.f32 %v730, 0.0
  %v795 = vmax.f32 %v731, 0.0
  %v796 = vmax.f32 %v732, 0.0
  %v797 = vmax.f32 %v733, 0.0
  %v798 = vmax.f32 %v734, 0.0
  %v799 = vmax.f32 %v735, 0.0
  %v800 = vmax.f32 %v736, 0.0
  %v801 = vmax.f32 %v737, 0.0
  %v802 = vmax.f32 %v738, 0.0
  %v803 = vmax.f32 %v739, 0.0
  %v804 = vmax.f32 %v740, 0.0
  %v805 = vmax.f32 %v741, 0.0
  %v806 = vmax.f32 %v742, 0.0
  %v807 = vmax.f32 %v743, 0.0
  %v808 = vmax.f32 %v744, 0.0
  %v809 = vmax.f32 %v745, 0.0
  %v810 = vmax.f32 %v746, 0.0
  %v811 = vmax.f32 %v747, 0.0
  %v812 = vmax.f32 %v748, 0.0
  %v813 = vmax.f32 %v749, 0.0
  %v814 = vmax.f32 %v750, 0.0
  %v815 = vmax.f32 %v751, 0.0
  %v816 = vmax.f32 %v752, 0.0
  %v817 = vmax.f32 %v753, 0.0
  %v818 = vmax.f32 %v754, 0.0
  %v819 = vmax.f32 %v755, 0.0
  %v820 = vmax.f32 %v756, 0.0
  %v821 = vmax.f32 %v757, 0.0
  %v822 = vmax.f32 %v758, 0.0
  %v823 = vmax.f32 %v759, 0.0
  %v824 = vmax.f32 %v760, 0.0
  %v825 = vmax.f32 %v761, 0.0
  %v826 = vmax.f32 %v762, 0.0
  %v827 = vmax.f32 %v763, 0.0
  %v828 = vmax.f32 %v764, 0.0
  %v829 = vmax.f32 %v765, 0.0
  %v830 = vmax.f32 %v766, 0.0
  %v831 = vmax.f32 %v767, 0.0
  %v832 = vmax.f32 %v768, 0.0
  %v833 = vmax.f32 %v769, 0.0
  %v834 = vmax.f32 %v770, 0.0
  %v835 = vmax.f32 %v771, 0.0
  %v836 = vmax.f32 %v772, 0.0
  %v837 = vmax.f32 %v773, 0.0
  %v838 = vmax.f32 %v774, 0.0
  %v839 = vpack.c.bf16 %v776, %v775
  %v840 = vpack.c.bf16 %v778, %v777
  %v841 = vpack.c.bf16 %v780, %v779
  %v842 = vpack.c.bf16 %v782, %v781
  %v843 = vpack.c.bf16 %v784, %v783
  %v844 = vpack.c.bf16 %v786, %v785
  %v845 = vpack.c.bf16 %v788, %v787
  %v846 = vpack.c.bf16 %v790, %v789
  %v847 = vpack.c.bf16 %v792, %v791
  %v848 = vpack.c.bf16 %v794, %v793
  %v849 = vpack.c.bf16 %v796, %v795
  %v850 = vpack.c.bf16 %v798, %v797
  %v851 = vpack.c.bf16 %v800, %v799
  %v852 = vpack.c.bf16 %v802, %v801
  %v853 = vpack.c.bf16 %v804, %v803
  %v854 = vpack.c.bf16 %v806, %v805
  %v855 = vpack.c.bf16 %v808, %v807
  %v856 = vpack.c.bf16 %v810, %v809
  %v857 = vpack.c.bf16 %v812, %v811
  %v858 = vpack.c.bf16 %v814, %v813
  %v859 = vpack.c.bf16 %v816, %v815
  %v860 = vpack.c.bf16 %v818, %v817
  %v861 = vpack.c.bf16 %v820, %v819
  %v862 = vpack.c.bf16 %v822, %v821
  %v863 = vpack.c.bf16 %v824, %v823
  %v864 = vpack.c.bf16 %v826, %v825
  %v865 = vpack.c.bf16 %v828, %v827
  %v866 = vpack.c.bf16 %v830, %v829
  %v867 = vpack.c.bf16 %v832, %v831
  %v868 = vpack.c.bf16 %v834, %v833
  %v869 = vpack.c.bf16 %v836, %v835
  %v870 = vpack.c.bf16 %v838, %v837
  %v903 = vunpack.c.l.b16 %v839
  %v904 = vunpack.c.h.b16 %v839
  %v905 = vunpack.c.l.b16 %v840
  %v906 = vunpack.c.h.b16 %v840
  %v907 = vunpack.c.l.b16 %v841
  %v908 = vunpack.c.h.b16 %v841
  %v909 = vunpack.c.l.b16 %v842
  %v910 = vunpack.c.h.b16 %v842
  %v911 = vunpack.c.l.b16 %v843
  %v912 = vunpack.c.h.b16 %v843
  %v913 = vunpack.c.l.b16 %v844
  %v914 = vunpack.c.h.b16 %v844
  %v915 = vunpack.c.l.b16 %v845
  %v916 = vunpack.c.h.b16 %v845
  %v917 = vunpack.c.l.b16 %v846
  %v918 = vunpack.c.h.b16 %v846
  %v919 = vunpack.c.l.b16 %v847
  %v920 = vunpack.c.h.b16 %v847
  %v921 = vunpack.c.l.b16 %v848
  %v922 = vunpack.c.h.b16 %v848
  %v923 = vunpack.c.l.b16 %v849
  %v924 = vunpack.c.h.b16 %v849
  %v925 = vunpack.c.l.b16 %v850
  %v926 = vunpack.c.h.b16 %v850
  %v927 = vunpack.c.l.b16 %v851
  %v928 = vunpack.c.h.b16 %v851
  %v929 = vunpack.c.l.b16 %v852
  %v930 = vunpack.c.h.b16 %v852
  %v931 = vunpack.c.l.b16 %v853
  %v932 = vunpack.c.h.b16 %v853
  %v933 = vunpack.c.l.b16 %v854
  %v934 = vunpack.c.h.b16 %v854
  %v935 = vunpack.c.l.b16 %v855
  %v936 = vunpack.c.h.b16 %v855
  %v937 = vunpack.c.l.b16 %v856
  %v938 = vunpack.c.h.b16 %v856
  %v939 = vunpack.c.l.b16 %v857
  %v940 = vunpack.c.h.b16 %v857
  %v941 = vunpack.c.l.b16 %v858
  %v942 = vunpack.c.h.b16 %v858
  %v943 = vunpack.c.l.b16 %v859
  %v944 = vunpack.c.h.b16 %v859
  %v945 = vunpack.c.l.b16 %v860
  %v946 = vunpack.c.h.b16 %v860
  %v947 = vunpack.c.l.b16 %v861
  %v948 = vunpack.c.h.b16 %v861
  %v949 = vunpack.c.l.b16 %v862
  %v950 = vunpack.c.h.b16 %v862
  %v951 = vunpack.c.l.b16 %v863
  %v952 = vunpack.c.h.b16 %v863
  %v953 = vunpack.c.l.b16 %v864
  %v954 = vunpack.c.h.b16 %v864
  %v955 = vunpack.c.l.b16 %v865
  %v956 = vunpack.c.h.b16 %v865
  %v957 = vunpack.c.l.b16 %v866
  %v958 = vunpack.c.h.b16 %v866
  %v959 = vunpack.c.l.b16 %v867
  %v960 = vunpack.c.h.b16 %v867
  %v961 = vunpack.c.l.b16 %v868
  %v962 = vunpack.c.h.b16 %v868
  %v963 = vunpack.c.l.b16 %v869
  %v964 = vunpack.c.h.b16 %v869
  %v965 = vunpack.c.l.b16 %v870
  %v966 = vunpack.c.h.b16 %v870
  %v967 = vpack.c.b16 %v903, %v903
  %v968 = vpack.c.b16 %v904, %v904
  %v969 = vpack.c.b16 %v905, %v905
  %v970 = vpack.c.b16 %v906, %v906
  %v971 = vpack.c.b16 %v907, %v907
  %v972 = vpack.c.b16 %v908, %v908
  %v973 = vpack.c.b16 %v909, %v909
  %v974 = vpack.c.b16 %v910, %v910
  %v975 = vpack.c.b16 %v911, %v911
  %v976 = vpack.c.b16 %v912, %v912
  %v977 = vpack.c.b16 %v913, %v913
  %v978 = vpack.c.b16 %v914, %v914
  %v979 = vpack.c.b16 %v915, %v915
  %v980 = vpack.c.b16 %v916, %v916
  %v981 = vpack.c.b16 %v917, %v917
  %v982 = vpack.c.b16 %v918, %v918
  %v983 = vpack.c.b16 %v919, %v919
  %v984 = vpack.c.b16 %v920, %v920
  %v985 = vpack.c.b16 %v921, %v921
  %v986 = vpack.c.b16 %v922, %v922
  %v987 = vpack.c.b16 %v923, %v923
  %v988 = vpack.c.b16 %v924, %v924
  %v989 = vpack.c.b16 %v925, %v925
  %v990 = vpack.c.b16 %v926, %v926
  %v991 = vpack.c.b16 %v927, %v927
  %v992 = vpack.c.b16 %v928, %v928
  %v993 = vpack.c.b16 %v929, %v929
  %v994 = vpack.c.b16 %v930, %v930
  %v995 = vpack.c.b16 %v931, %v931
  %v996 = vpack.c.b16 %v932, %v932
  %v997 = vpack.c.b16 %v933, %v933
  %v998 = vpack.c.b16 %v934, %v934
  %v999 = vpack.c.b16 %v935, %v935
  %v1000 = vpack.c.b16 %v936, %v936
  %v1001 = vpack.c.b16 %v937, %v937
  %v1002 = vpack.c.b16 %v938, %v938
  %v1003 = vpack.c.b16 %v939, %v939
  %v1004 = vpack.c.b16 %v940, %v940
  %v1005 = vpack.c.b16 %v941, %v941
  %v1006 = vpack.c.b16 %v942, %v942
  %v1007 = vpack.c.b16 %v943, %v943
  %v1008 = vpack.c.b16 %v944, %v944
  %v1009 = vpack.c.b16 %v945, %v945
  %v1010 = vpack.c.b16 %v946, %v946
  %v1011 = vpack.c.b16 %v947, %v947
  %v1012 = vpack.c.b16 %v948, %v948
  %v1013 = vpack.c.b16 %v949, %v949
  %v1014 = vpack.c.b16 %v950, %v950
  %v1015 = vpack.c.b16 %v951, %v951
  %v1016 = vpack.c.b16 %v952, %v952
  %v1017 = vpack.c.b16 %v953, %v953
  %v1018 = vpack.c.b16 %v954, %v954
  %v1019 = vpack.c.b16 %v955, %v955
  %v1020 = vpack.c.b16 %v956, %v956
  %v1021 = vpack.c.b16 %v957, %v957
  %v1022 = vpack.c.b16 %v958, %v958
  %v1023 = vpack.c.b16 %v959, %v959
  %v1024 = vpack.c.b16 %v960, %v960
  %v1025 = vpack.c.b16 %v961, %v961
  %v1026 = vpack.c.b16 %v962, %v962
  %v1027 = vpack.c.b16 %v963, %v963
  %v1028 = vpack.c.b16 %v964, %v964
  %v1029 = vpack.c.b16 %v965, %v965
  %v1030 = vpack.c.b16 %v966, %v966
  %vm1095 = vcmask 27648
  %1096 = vst.msk [vmem:[%s4] sm:$0xf] %vm1095, %v967
  %1097 = vst.msk [vmem:[%s4 + $0x4] sm:$0xf] %vm1095, %v968
  %1098 = vst.msk [vmem:[%s4 + $0x8] sm:$0xf] %vm1095, %v969
  %1099 = vst.msk [vmem:[%s4 + $0xc] sm:$0xf] %vm1095, %v970
  %1100 = vst.msk [vmem:[%s4 + $0x10] sm:$0xf] %vm1095, %v971
  %1101 = vst.msk [vmem:[%s4 + $0x14] sm:$0xf] %vm1095, %v972
  %1102 = vst.msk [vmem:[%s4 + $0x18] sm:$0xf] %vm1095, %v973
  %1103 = vst.msk [vmem:[%s4 + $0x1c] sm:$0xf] %vm1095, %v974
  %1104 = vst.msk [vmem:[%s4 + $0x20] sm:$0xf] %vm1095, %v975
  %1105 = vst.msk [vmem:[%s4 + $0x24] sm:$0xf] %vm1095, %v976
  %1106 = vst.msk [vmem:[%s4 + $0x28] sm:$0xf] %vm1095, %v977
  %1107 = vst.msk [vmem:[%s4 + $0x2c] sm:$0xf] %vm1095, %v978
  %1108 = vst.msk [vmem:[%s4 + $0x30] sm:$0xf] %vm1095, %v979
  %1109 = vst.msk [vmem:[%s4 + $0x34] sm:$0xf] %vm1095, %v980
  %1110 = vst.msk [vmem:[%s4 + $0x38] sm:$0xf] %vm1095, %v981
  %1111 = vst.msk [vmem:[%s4 + $0x3c] sm:$0xf] %vm1095, %v982
  %1112 = vst.msk [vmem:[%s4 + $0x40] sm:$0xf] %vm1095, %v983
  %1113 = vst.msk [vmem:[%s4 + $0x44] sm:$0xf] %vm1095, %v984
  %1114 = vst.msk [vmem:[%s4 + $0x48] sm:$0xf] %vm1095, %v985
  %1115 = vst.msk [vmem:[%s4 + $0x4c] sm:$0xf] %vm1095, %v986
  %1116 = vst.msk [vmem:[%s4 + $0x50] sm:$0xf] %vm1095, %v987
  %1117 = vst.msk [vmem:[%s4 + $0x54] sm:$0xf] %vm1095, %v988
  %1118 = vst.msk [vmem:[%s4 + $0x58] sm:$0xf] %vm1095, %v989
  %1119 = vst.msk [vmem:[%s4 + $0x5c] sm:$0xf] %vm1095, %v990
  %1120 = vst.msk [vmem:[%s4 + $0x60] sm:$0xf] %vm1095, %v991
  %1121 = vst.msk [vmem:[%s4 + $0x64] sm:$0xf] %vm1095, %v992
  %1122 = vst.msk [vmem:[%s4 + $0x68] sm:$0xf] %vm1095, %v993
  %1123 = vst.msk [vmem:[%s4 + $0x6c] sm:$0xf] %vm1095, %v994
  %1124 = vst.msk [vmem:[%s4 + $0x70] sm:$0xf] %vm1095, %v995
  %1125 = vst.msk [vmem:[%s4 + $0x74] sm:$0xf] %vm1095, %v996
  %1126 = vst.msk [vmem:[%s4 + $0x78] sm:$0xf] %vm1095, %v997
  %1127 = vst.msk [vmem:[%s4 + $0x7c] sm:$0xf] %vm1095, %v998
  %1128 = vst.msk [vmem:[%s4 + $0x80] sm:$0xf] %vm1095, %v999
  %1129 = vst.msk [vmem:[%s4 + $0x84] sm:$0xf] %vm1095, %v1000
  %1130 = vst.msk [vmem:[%s4 + $0x88] sm:$0xf] %vm1095, %v1001
  %1131 = vst.msk [vmem:[%s4 + $0x8c] sm:$0xf] %vm1095, %v1002
  %1132 = vst.msk [vmem:[%s4 + $0x90] sm:$0xf] %vm1095, %v1003
  %1133 = vst.msk [vmem:[%s4 + $0x94] sm:$0xf] %vm1095, %v1004
  %1134 = vst.msk [vmem:[%s4 + $0x98] sm:$0xf] %vm1095, %v1005
  %1135 = vst.msk [vmem:[%s4 + $0x9c] sm:$0xf] %vm1095, %v1006
  %1136 = vst.msk [vmem:[%s4 + $0xa0] sm:$0xf] %vm1095, %v1007
  %1137 = vst.msk [vmem:[%s4 + $0xa4] sm:$0xf] %vm1095, %v1008
  %1138 = vst.msk [vmem:[%s4 + $0xa8] sm:$0xf] %vm1095, %v1009
  %1139 = vst.msk [vmem:[%s4 + $0xac] sm:$0xf] %vm1095, %v1010
  %1140 = vst.msk [vmem:[%s4 + $0xb0] sm:$0xf] %vm1095, %v1011
  %1141 = vst.msk [vmem:[%s4 + $0xb4] sm:$0xf] %vm1095, %v1012
  %1142 = vst.msk [vmem:[%s4 + $0xb8] sm:$0xf] %vm1095, %v1013
  %1143 = vst.msk [vmem:[%s4 + $0xbc] sm:$0xf] %vm1095, %v1014
  %1144 = vst.msk [vmem:[%s4 + $0xc0] sm:$0xf] %vm1095, %v1015
  %1145 = vst.msk [vmem:[%s4 + $0xc4] sm:$0xf] %vm1095, %v1016
  %1146 = vst.msk [vmem:[%s4 + $0xc8] sm:$0xf] %vm1095, %v1017
  %1147 = vst.msk [vmem:[%s4 + $0xcc] sm:$0xf] %vm1095, %v1018
  %1148 = vst.msk [vmem:[%s4 + $0xd0] sm:$0xf] %vm1095, %v1019
  %1149 = vst.msk [vmem:[%s4 + $0xd4] sm:$0xf] %vm1095, %v1020
  %1150 = vst.msk [vmem:[%s4 + $0xd8] sm:$0xf] %vm1095, %v1021
  %1151 = vst.msk [vmem:[%s4 + $0xdc] sm:$0xf] %vm1095, %v1022
  %1152 = vst.msk [vmem:[%s4 + $0xe0] sm:$0xf] %vm1095, %v1023
  %1153 = vst.msk [vmem:[%s4 + $0xe4] sm:$0xf] %vm1095, %v1024
  %1154 = vst.msk [vmem:[%s4 + $0xe8] sm:$0xf] %vm1095, %v1025
  %1155 = vst.msk [vmem:[%s4 + $0xec] sm:$0xf] %vm1095, %v1026
  %1156 = vst.msk [vmem:[%s4 + $0xf0] sm:$0xf] %vm1095, %v1027
  %1157 = vst.msk [vmem:[%s4 + $0xf4] sm:$0xf] %vm1095, %v1028
  %1158 = vst.msk [vmem:[%s4 + $0xf8] sm:$0xf] %vm1095, %v1029
  %1159 = vst.msk [vmem:[%s4 + $0xfc] sm:$0xf] %vm1095, %v1030
  // Predicated region
  $region18: #{tpu_custom_call.1} parent=0 // pred_check
    _
  $region19: #{tpu_custom_call.1} parent=0 // pred_check_branch
    %1161 = sbr.rel (0) target = $region21
  $region20: #{tpu_custom_call.1} parent=0 // pred_region
    _
  $region21: #{tpu_custom_call.1} parent=0 // pred_fallthru
    _
  // Predicated region
  $region22: #{tpu_custom_call.1} parent=0 // pred_check
    _
  $region23: #{tpu_custom_call.1} parent=0 // pred_check_branch
    %1163 = sbr.rel (0) target = $region25
  $region24: #{tpu_custom_call.1} parent=0 // pred_region
    _
  $region25: #{tpu_custom_call.1} parent=0 // pred_fallthru
    _

</llo_original>
